<compile_context>
chip_gen: v6e
topology: v6e:2x2x1
jax: 0.10.0
libtpu: 0.0.40
codegen_flags: <defaults>
</compile_context>

<pallas_src>
import jax
import jax.numpy as jnp
from jax.experimental import pallas as pl
from jax.experimental.pallas import tpu as pltpu


def _make_layernorm_kernel(eps, C):
    inv_c = 1.0 / C
    # torch.std uses ddof=1; for C == 1 torch produces NaN and so do we.
    inv_cm1 = 1.0 / (C - 1) if C > 1 else float("nan")

    def layernorm_kernel(x_ref, g_ref, b_ref, o_ref):
        # x_ref: (TB, C, tS), g_ref/b_ref: (1, C, 1), o_ref: (TB, C, tS)
        x = x_ref[...].astype(jnp.float32)

        # Two-pass moments over the channel (sublane) axis: numerically stable
        # and still a single VMEM-resident pass over x.
        mean = jnp.sum(x, axis=1, keepdims=True) * inv_c        # (TB, 1, tS)
        xc = x - mean
        var = jnp.sum(xc * xc, axis=1, keepdims=True) * inv_cm1  # unbiased ddof=1
        std = jnp.sqrt(var)

        # eps is added to std (NOT to var) to match the torch module.
        inv = 1.0 / (std + eps)                                  # full precision

        g = g_ref[...].astype(jnp.float32)                       # (1, C, 1) broadcasts
        b = b_ref[...].astype(jnp.float32)
        out = g * (xc * inv) + b
        o_ref[...] = out.astype(o_ref.dtype)

    return layernorm_kernel


def layernorm(x, gamma, beta, eps=1e-6, *,
              max_block_s=512, target_block_bytes=2 * 1024 * 1024):
    """Pallas LayerNorm over dim=1 of a (B, C, S) input (BCS layout)."""
    B, C, S = x.shape

    # Sequence tile: keep the whole S if it is small (block last-dim == full
    # array dim is always legal); otherwise use a lane-dense multiple of 128.
    if S <= max_block_s:
        tS = S
    else:
        tS = max_block_s  # multiple of 128

    # Pack as many batches per grid step as fit the per-block VMEM budget
    # (f32 working copy is the dominant term).
    elems_per_batch = C * tS
    TB = int(max(1, min(B, target_block_bytes // (elems_per_batch * 4))))

    grid = (pl.cdiv(B, TB), pl.cdiv(S, tS))
    kernel = _make_layernorm_kernel(eps, C)

    return pl.pallas_call(
        kernel,
        out_shape=jax.ShapeDtypeStruct((B, C, S), x.dtype),
        grid_spec=pltpu.PrefetchScalarGridSpec(
            num_scalar_prefetch=0,
            grid=grid,
            in_specs=[
                pl.BlockSpec((TB, C, tS), lambda bi, si: (bi, 0, si)),
                pl.BlockSpec((1, C, 1), lambda bi, si: (0, 0, 0)),
                pl.BlockSpec((1, C, 1), lambda bi, si: (0, 0, 0)),
            ],
            out_specs=pl.BlockSpec((TB, C, tS), lambda bi, si: (bi, 0, si)),
        ),
        compiler_params=pltpu.CompilerParams(
            dimension_semantics=("parallel", "parallel"),
            vmem_limit_bytes=32 * 1024 * 1024,
        ),
    )(x, gamma, beta)


def layernorm_ref(x, gamma, beta, eps=1e-6):
    """Pure-JAX reference mirroring the PyTorch forward exactly."""
    mean = jnp.mean(x, axis=1, keepdims=True)
    std = jnp.std(x, axis=1, keepdims=True, ddof=1)  # unbiased, like torch.std
    return gamma * (x - mean) / (std + eps) + beta


def _check(B, C, S, key):
    x = jax.random.normal(key, (B, C, S), dtype=jnp.float32)
    gamma = jnp.ones((1, C, 1), dtype=jnp.float32)
    beta = jnp.zeros((1, C, 1), dtype=jnp.float32)

    out = jax.block_until_ready(layernorm(x, gamma, beta))
    ref = layernorm_ref(x, gamma, beta)

    assert out.shape == (B, C, S)
    assert jnp.allclose(out, ref, atol=1e-4, rtol=1e-4), \
        f"mismatch vs reference for shape {(B, C, S)}"


if __name__ == "__main__":
    key = jax.random.PRNGKey(0)
    k1, k2 = jax.random.split(key)

    # Small shape implied by the module: (batch, nchannels, sequence_length).
    # Whole problem collapses to a single grid step.
    _check(2, 4, 16, k1)

    # Larger shape exercising the tiled path: TB batching + 512-lane S tiles.
    _check(3, 8, 1536, k2)

    print("KERNEL_OK")
</pallas_src>

<mosaic_0001>
module attributes {stable_mosaic.version = 11 : i64} {
  func.func @layernorm_kernel(%arg0: i32, %arg1: i32, %arg2: memref<2x4x16xf32, #tpu.memory_space<vmem>>, %arg3: memref<1x4x1xf32, #tpu.memory_space<vmem>>, %arg4: memref<1x4x1xf32, #tpu.memory_space<vmem>>, %arg5: memref<2x4x16xf32, #tpu.memory_space<vmem>>) attributes {dimension_semantics = [#tpu.dimension_semantics<parallel>, #tpu.dimension_semantics<parallel>], iteration_bounds = array<i64: 1, 1>, scalar_prefetch = 0 : i64, scratch_operands = 0 : i64, tpu.core_type = #tpu.core_type<tc>, window_params = [{transform_indices = @transform_0, window_bounds = array<i64: 2, 4, 16>}, {pipeline_mode = #tpu.pipeline_mode<synchronous>, transform_indices = @transform_1, window_bounds = array<i64: 1, 4, 1>}, {pipeline_mode = #tpu.pipeline_mode<synchronous>, transform_indices = @transform_2, window_bounds = array<i64: 1, 4, 1>}, {transform_indices = @transform_3, window_bounds = array<i64: 2, 4, 16>}]} {
    %c0 = arith.constant 0 : index
    %c0_0 = arith.constant 0 : index
    %c0_1 = arith.constant 0 : index
    %0 = vector.load %arg2[%c0, %c0_0, %c0_1] : memref<2x4x16xf32, #tpu.memory_space<vmem>>, vector<2x4x16xf32>
    %cst = arith.constant dense<0.000000e+00> : vector<2x16xf32>
    %1 = vector.multi_reduction <add>, %0, %cst [1] : vector<2x4x16xf32> to vector<2x16xf32>
    %2 = vector.shape_cast %1 : vector<2x16xf32> to vector<2x1x16xf32>
    %cst_2 = arith.constant 2.500000e-01 : f32
    %3 = vector.broadcast %cst_2 : f32 to vector<2x1x16xf32>
    %4 = arith.mulf %2, %3 : vector<2x1x16xf32>
    %5 = vector.broadcast %4 : vector<2x1x16xf32> to vector<2x4x16xf32>
    %6 = arith.subf %0, %5 : vector<2x4x16xf32>
    %7 = arith.mulf %6, %6 : vector<2x4x16xf32>
    %cst_3 = arith.constant dense<0.000000e+00> : vector<2x16xf32>
    %8 = vector.multi_reduction <add>, %7, %cst_3 [1] : vector<2x4x16xf32> to vector<2x16xf32>
    %9 = vector.shape_cast %8 : vector<2x16xf32> to vector<2x1x16xf32>
    %cst_4 = arith.constant 0.333333343 : f32
    %10 = vector.broadcast %cst_4 : f32 to vector<2x1x16xf32>
    %11 = arith.mulf %9, %10 : vector<2x1x16xf32>
    %12 = math.sqrt %11 : vector<2x1x16xf32>
    %cst_5 = arith.constant 9.99999997E-7 : f32
    %13 = vector.broadcast %cst_5 : f32 to vector<2x1x16xf32>
    %14 = arith.addf %12, %13 : vector<2x1x16xf32>
    %cst_6 = arith.constant 1.000000e+00 : f32
    %15 = vector.broadcast %cst_6 : f32 to vector<2x1x16xf32>
    %16 = arith.divf %15, %14 : vector<2x1x16xf32>
    %c0_7 = arith.constant 0 : index
    %c0_8 = arith.constant 0 : index
    %c0_9 = arith.constant 0 : index
    %17 = vector.load %arg3[%c0_7, %c0_8, %c0_9] : memref<1x4x1xf32, #tpu.memory_space<vmem>>, vector<1x4x1xf32>
    %c0_10 = arith.constant 0 : index
    %c0_11 = arith.constant 0 : index
    %c0_12 = arith.constant 0 : index
    %18 = vector.load %arg4[%c0_10, %c0_11, %c0_12] : memref<1x4x1xf32, #tpu.memory_space<vmem>>, vector<1x4x1xf32>
    %19 = vector.broadcast %16 : vector<2x1x16xf32> to vector<2x4x16xf32>
    %20 = arith.mulf %6, %19 : vector<2x4x16xf32>
    %21 = vector.broadcast %17 : vector<1x4x1xf32> to vector<2x4x16xf32>
    %22 = arith.mulf %21, %20 : vector<2x4x16xf32>
    %23 = vector.broadcast %18 : vector<1x4x1xf32> to vector<2x4x16xf32>
    %24 = arith.addf %22, %23 : vector<2x4x16xf32>
    %c0_13 = arith.constant 0 : index
    %c0_14 = arith.constant 0 : index
    %c0_15 = arith.constant 0 : index
    %25 = vector.load %arg5[%c0_13, %c0_14, %c0_15] : memref<2x4x16xf32, #tpu.memory_space<vmem>>, vector<2x4x16xf32>
    tpu.vector_store %arg5[%c0_13, %c0_14, %c0_15], %24 {strides = array<i32>} : memref<2x4x16xf32, #tpu.memory_space<vmem>>, vector<2x4x16xf32>,
    return
  }
  func.func @transform_0(%arg0: i32, %arg1: i32) -> (i32, i32, i32) {
    %c0_i32 = arith.constant 0 : i32
    %c0_i32_0 = arith.constant 0 : i32
    return %arg0, %c0_i32, %arg1 : i32, i32, i32
  }
  func.func @transform_1(%arg0: i32, %arg1: i32) -> (i32, i32, i32) {
    %c0_i32 = arith.constant 0 : i32
    %c0_i32_0 = arith.constant 0 : i32
    %c0_i32_1 = arith.constant 0 : i32
    %c0_i32_2 = arith.constant 0 : i32
    return %c0_i32, %c0_i32_0, %c0_i32_1 : i32, i32, i32
  }
  func.func @transform_2(%arg0: i32, %arg1: i32) -> (i32, i32, i32) {
    %c0_i32 = arith.constant 0 : i32
    %c0_i32_0 = arith.constant 0 : i32
    %c0_i32_1 = arith.constant 0 : i32
    %c0_i32_2 = arith.constant 0 : i32
    return %c0_i32, %c0_i32_0, %c0_i32_1 : i32, i32, i32
  }
  func.func @transform_3(%arg0: i32, %arg1: i32) -> (i32, i32, i32) {
    %c0_i32 = arith.constant 0 : i32
    %c0_i32_0 = arith.constant 0 : i32
    return %arg0, %c0_i32, %arg1 : i32, i32, i32
  }
}

</mosaic_0001>

<llo_original>
// kernel: tpu_custom_call.1
$region0: #{tpu_custom_call.1}
  #allocation0 [shape = 'u32[]', space=smem, size = 0x4, offset = 0x4, fixed_abs, tag = 'smem constant byte address 0x4 - core index']
  #allocation1 [shape = 'u32[144,128]{1,0:T(1,128)}', space=vmem, size = 0x12000, scoped, tag = 'internal scratch']
  %s0 = inlined_call_operand.vmem [shape: f32[2,4,16], index: 0, kind: input, shape index: {}]
  %s1 = inlined_call_operand.vmem [shape: f32[1,4,1], index: 1, kind: input, shape index: {}]
  %s2 = inlined_call_operand.vmem [shape: f32[1,4,1], index: 2, kind: input, shape index: {}]
  %s3 = inlined_call_operand.hbm [shape: f32[2,4,16], index: 3, kind: output, shape index: {}]
  %s4 = sld [smem:[#allocation0]]
  $region22: #{tpu_custom_call.1} parent=0
    _
  %s6 = ssub.s32 1, %s4
  %s7 = scalar_select 0, %s6, %s4
  $region1: #{tpu_custom_call.1} parent=0
    #allocation2 [shape = 'u8[4096]{0}', space=vmem, size = 0x1000, scoped, tag = 'output window, operand 0, single buffered']
    #allocation3 [shape = 's32[1]{0}', space=sflag, size = 0x4, scoped, tag = 'scoped memory for tpu_custom_call.1']
    %8 = vsyncpa [#allocation3], 0
    // Predicated region
    $region2: #{tpu_custom_call.1} parent=1 // pred_check
      _
    $region3: #{tpu_custom_call.1} parent=1 // pred_check_branch
      %10 = sbr.rel (0) target = $region5
    $region4: #{tpu_custom_call.1} parent=1 // pred_region
      _
    $region5: #{tpu_custom_call.1} parent=1 // pred_fallthru
      _
    // Predicated region
    $region6: #{tpu_custom_call.1} parent=1 // pred_check
      _
    $region7: #{tpu_custom_call.1} parent=1 // pred_check_branch
      %12 = sbr.rel (0) target = $region9
    $region8: #{tpu_custom_call.1} parent=1 // pred_region
      _
    $region9: #{tpu_custom_call.1} parent=1 // pred_fallthru
      _
    // Predicated region
    $region10: #{tpu_custom_call.1} parent=1 // pred_check
      _
    $region11: #{tpu_custom_call.1} parent=1 // pred_check_branch
      %14 = sbr.rel (0) target = $region13
    $region12: #{tpu_custom_call.1} parent=1 // pred_region
      _
    $region13: #{tpu_custom_call.1} parent=1 // pred_fallthru
      _
    %v15 = vld [vmem:[%s0] sm:$0xf]
    %v16 = vld [vmem:[%s0 + $0x4] sm:$0xf]
    %vm17 = vcmask 125952
    %v18 = vsel %vm17, %v15, 0.0
    %v19 = vrot.slane %v18, 4
    %v20 = vadd.f32 %v18, %v19
    %v21 = vrot.slane %v20, 2
    %v22 = vadd.f32 %v20, %v21
    %v23 = vrot.slane %v22, 1
    %v24 = vadd.f32 %v22, %v23
    %v25 = vsel %vm17, %v16, 0.0
    %v26 = vrot.slane %v25, 4
    %v27 = vadd.f32 %v25, %v26
    %v28 = vrot.slane %v27, 2
    %v29 = vadd.f32 %v27, %v28
    %v30 = vrot.slane %v29, 1
    %v31 = vadd.f32 %v29, %v30
    %v32 = vmul.f32 %v24, 0.25
    %v33 = vmul.f32 %v31, 0.25
    %v34 = vsub.f32 %v15, %v32
    %v35 = vsub.f32 %v16, %v33
    %v36 = vmul.f32 %v34, %v34
    %v37 = vmul.f32 %v35, %v35
    %v38 = vsel %vm17, %v36, 0.0
    %v39 = vrot.slane %v38, 4
    %v40 = vadd.f32 %v38, %v39
    %v41 = vrot.slane %v40, 2
    %v42 = vadd.f32 %v40, %v41
    %v43 = vrot.slane %v42, 1
    %v44 = vadd.f32 %v42, %v43
    %v45 = vsel %vm17, %v37, 0.0
    %v46 = vrot.slane %v45, 4
    %v47 = vadd.f32 %v45, %v46
    %v48 = vrot.slane %v47, 2
    %v49 = vadd.f32 %v47, %v48
    %v50 = vrot.slane %v49, 1
    %v51 = vadd.f32 %v49, %v50
    %v52 = vmul.f32 %v44, 0.33333334
    %v53 = vmul.f32 %v51, 0.33333334
    %v54 = vrsqrt.pop %v52
    %v55 = vmul.f32 %v52, %v54
    %vm56 = vcmp.eq.f32.partialorder %v52, inf
    %v57 = vsel %vm56, %v52, %v55
    %vm58 = vcmp.eq.f32.partialorder %v52, 0.0
    %v59 = vand.u32 %v52, 2147483648
    %v60 = vsel %vm58, %v59, %v57
    %v61 = vrsqrt.pop %v53
    %v62 = vmul.f32 %v53, %v61
    %vm63 = vcmp.eq.f32.partialorder %v53, inf
    %v64 = vsel %vm63, %v53, %v62
    %vm65 = vcmp.eq.f32.partialorder %v53, 0.0
    %v66 = vand.u32 %v53, 2147483648
    %v67 = vsel %vm65, %v66, %v64
    %v68 = vadd.f32 %v60, 1e-06
    %v69 = vadd.f32 %v67, 1e-06
    %v70 = vrcp.pop %v68
    %v71 = vmul.f32 1.0, %v70
    %v72 = vrcp.pop %v69
    %v73 = vmul.f32 1.0, %v72
    %v74 = vld [vmem:[%s1] sm:$0xf]
    %v75 = vld [vmem:[%s2] sm:$0xf]
    %v76 = vmul.f32 %v34, %v71
    %v77 = vmul.f32 %v35, %v73
    %79 = vset.pattern.permute.xlu0 0
    %80 = vperm.xlu0 %79, %v74
    %v81 = vpop.permute.xlu0 %80
    %v83 = vmul.f32 %v81, %v76
    %v84 = vmul.f32 %v81, %v77
    %86 = vset.pattern.permute.xlu0 0
    %87 = vperm.xlu0 %86, %v75
    %v88 = vpop.permute.xlu0 %87
    %v90 = vadd.f32 %v83, %v88
    %v91 = vadd.f32 %v84, %v88
    %92 = vst.msk [vmem:[#allocation2] sm:$0xf] %vm17, %v90
    %93 = vst.msk [vmem:[#allocation2 + $0x4] sm:$0xf] %vm17, %v91
    // Predicated region
    $region14: #{tpu_custom_call.1} parent=1 // pred_check
      _
    $region15: #{tpu_custom_call.1} parent=1 // pred_check_branch
      %95 = sbr.rel (0) target = $region17
    $region16: #{tpu_custom_call.1} parent=1 // pred_region
      %s97 = ssub.s32 128, 128
      %98 = vsyncadd [#allocation3], %s97
      %s99 = sshll.u32 [#allocation2], 4
      %s100 = int_to_ptr.vmem [resolvable:$true] %s99
      %105 = dma.vmem_to_hbm [thread:$0]  %s100, 128, %s3, [#allocation3], 64, 64, 4
    $region17: #{tpu_custom_call.1} parent=1 // pred_fallthru
      _
    // Predicated region
    $region18: #{tpu_custom_call.1} parent=1 // pred_check
      _
    $region19: #{tpu_custom_call.1} parent=1 // pred_check_branch
      %107 = sbr.rel (0) target = $region21
    $region20: #{tpu_custom_call.1} parent=1 // pred_region
      %108 = dma.done [#allocation3], 128
    $region21: #{tpu_custom_call.1} parent=1 // pred_fallthru
      _
    %109 = vsyncpa [#allocation3], 1

</llo_original>
